<compile_context>
chip_gen: v7x
topology: tpu7x:2x2x1
jax: 0.10.0
libtpu: 0.0.40
codegen_flags: <defaults>
</compile_context>

<pallas_src>
import jax
import jax.numpy as jnp
from jax.experimental import pallas as pl
from jax.experimental.pallas import tpu as pltpu

_LANES = 512            # lane-dense last dim (multiple of 128)
_TILE_R = 512           # rows per grid step -> (512, 512) f32 tile = 1 MiB/buffer
_SMALL_BYTES = 4 << 20  # total HBM traffic threshold for single-block fast path


def _circuit_kernel(x1_ref, x2_ref, a_ref, b_ref, c_ref):
    x1 = x1_ref[...]
    x2 = x2_ref[...]
    # ANDGate: (x1 * x2).float()
    a_ref[...] = (x1 * x2).astype(jnp.float32)
    # ORGate: (x1 + x2 > 0).float()
    b = (x1 + x2 > 0).astype(jnp.float32)
    b_ref[...] = b
    # NOTGate: 1 - b
    c_ref[...] = 1.0 - b


def circuit_composer(x1, x2):
    assert x1.shape == x2.shape and x1.dtype == x2.dtype
    orig_shape = x1.shape
    n_elem = x1.size

    # Pad the flat length to a multiple of (8 * _LANES) so the slab is
    # (rows, 512) with rows % 8 == 0 -> full unmasked vreg tiles everywhere.
    chunk = 8 * _LANES
    n_pad = ((n_elem + chunk - 1) // chunk) * chunk
    pad = n_pad - n_elem
    rows = n_pad // _LANES

    def flatten(x):
        xf = x.reshape(-1)
        if pad:
            xf = jnp.pad(xf, (0, pad))
        return xf.reshape(rows, _LANES)

    x1f = flatten(x1)
    x2f = flatten(x2)

    out_sds = jax.ShapeDtypeStruct((rows, _LANES), jnp.float32)
    in_bytes = 2 * x1f.dtype.itemsize * n_pad
    out_bytes = 3 * 4 * n_pad
    cost = pl.CostEstimate(
        flops=3 * n_pad, transcendentals=0, bytes_accessed=in_bytes + out_bytes)

    if in_bytes + out_bytes <= _SMALL_BYTES:
        # Small-input fast path: one VMEM-resident block, no per-step overhead.
        spec = pl.BlockSpec((rows, _LANES), lambda: (0, 0))
        a, b, c = pl.pallas_call(
            _circuit_kernel,
            out_shape=(out_sds, out_sds, out_sds),
            grid_spec=pl.GridSpec(
                grid=(),
                in_specs=[spec, spec],
                out_specs=(spec, spec, spec)),
            cost_estimate=cost,
        )(x1f, x2f)
    else:
        # HBM-bandwidth-bound path: 1-D row-tile grid, auto double-buffered.
        spec = pl.BlockSpec((_TILE_R, _LANES), lambda i: (i, 0))
        a, b, c = pl.pallas_call(
            _circuit_kernel,
            out_shape=(out_sds, out_sds, out_sds),
            grid_spec=pl.GridSpec(
                grid=(pl.cdiv(rows, _TILE_R),),
                in_specs=[spec, spec],
                out_specs=(spec, spec, spec)),
            compiler_params=pltpu.CompilerParams(
                dimension_semantics=("parallel",)),
            cost_estimate=cost,
        )(x1f, x2f)

    def unflatten(y):
        return y.reshape(-1)[:n_elem].reshape(orig_shape)

    return unflatten(a), unflatten(b), unflatten(c)


def _reference(x1, x2):
    a = (x1 * x2).astype(jnp.float32)
    b = (x1 + x2 > 0).astype(jnp.float32)
    c = 1.0 - b
    return a, b, c


if __name__ == "__main__":
    key = jax.random.PRNGKey(0)
    k1, k2 = jax.random.split(key)
    # Small NCHW inputs; binary-ish values, like logic-gate activations.
    shape = (2, 4, 16, 16)
    x1 = jax.random.bernoulli(k1, 0.5, shape).astype(jnp.float32)
    x2 = jax.random.bernoulli(k2, 0.5, shape).astype(jnp.float32)

    a, b, c = circuit_composer(x1, x2)
    jax.block_until_ready((a, b, c))

    a_ref, b_ref, c_ref = _reference(x1, x2)
    assert a.shape == shape and b.shape == shape and c.shape == shape
    assert jnp.allclose(a, a_ref)
    assert jnp.allclose(b, b_ref)
    assert jnp.allclose(c, c_ref)

    # Exercise the tiled (large-input) path as well, to cover both branches.
    big_shape = (8, 16, 128, 128)  # 1M elems -> ~20 MB traffic -> tiled path
    kb1, kb2 = jax.random.split(jax.random.PRNGKey(1))
    y1 = jax.random.bernoulli(kb1, 0.5, big_shape).astype(jnp.float32)
    y2 = jax.random.bernoulli(kb2, 0.5, big_shape).astype(jnp.float32)
    ba, bb, bc = circuit_composer(y1, y2)
    jax.block_until_ready((ba, bb, bc))
    ra, rb, rc = _reference(y1, y2)
    assert jnp.allclose(ba, ra) and jnp.allclose(bb, rb) and jnp.allclose(bc, rc)

    print("KERNEL_OK")
</pallas_src>

<mosaic_0001>
module attributes {stable_mosaic.version = 11 : i64} {
  func.func @_circuit_kernel(%arg0: memref<8x512xf32, #tpu.memory_space<vmem>>, %arg1: memref<8x512xf32, #tpu.memory_space<vmem>>, %arg2: memref<8x512xf32, #tpu.memory_space<vmem>>, %arg3: memref<8x512xf32, #tpu.memory_space<vmem>>, %arg4: memref<8x512xf32, #tpu.memory_space<vmem>>) attributes {dimension_semantics = [], scalar_prefetch = 0 : i64, scratch_operands = 0 : i64, tpu.core_type = #tpu.core_type<tc>} {
    %c0 = arith.constant 0 : index
    %c0_0 = arith.constant 0 : index
    %0 = vector.load %arg0[%c0, %c0_0] : memref<8x512xf32, #tpu.memory_space<vmem>>, vector<8x512xf32>
    %c0_1 = arith.constant 0 : index
    %c0_2 = arith.constant 0 : index
    %1 = vector.load %arg1[%c0_1, %c0_2] : memref<8x512xf32, #tpu.memory_space<vmem>>, vector<8x512xf32>
    %2 = arith.mulf %0, %1 : vector<8x512xf32>
    %c0_3 = arith.constant 0 : index
    %c0_4 = arith.constant 0 : index
    %3 = vector.load %arg2[%c0_3, %c0_4] : memref<8x512xf32, #tpu.memory_space<vmem>>, vector<8x512xf32>
    tpu.vector_store %arg2[%c0_3, %c0_4], %2 {strides = array<i32>} : memref<8x512xf32, #tpu.memory_space<vmem>>, vector<8x512xf32>,
    %4 = arith.addf %0, %1 : vector<8x512xf32>
    %cst = arith.constant 0.000000e+00 : f32
    %5 = vector.broadcast %cst : f32 to vector<8x512xf32>
    %6 = arith.cmpf ogt, %4, %5 : vector<8x512xf32>
    %7 = arith.extui %6 : vector<8x512xi1> to vector<8x512xi32>
    %8 = arith.sitofp %7 : vector<8x512xi32> to vector<8x512xf32>
    %c0_5 = arith.constant 0 : index
    %c0_6 = arith.constant 0 : index
    %9 = vector.load %arg3[%c0_5, %c0_6] : memref<8x512xf32, #tpu.memory_space<vmem>>, vector<8x512xf32>
    tpu.vector_store %arg3[%c0_5, %c0_6], %8 {strides = array<i32>} : memref<8x512xf32, #tpu.memory_space<vmem>>, vector<8x512xf32>,
    %cst_7 = arith.constant 1.000000e+00 : f32
    %10 = vector.broadcast %cst_7 : f32 to vector<8x512xf32>
    %11 = arith.subf %10, %8 : vector<8x512xf32>
    %c0_8 = arith.constant 0 : index
    %c0_9 = arith.constant 0 : index
    %12 = vector.load %arg4[%c0_8, %c0_9] : memref<8x512xf32, #tpu.memory_space<vmem>>, vector<8x512xf32>
    tpu.vector_store %arg4[%c0_8, %c0_9], %11 {strides = array<i32>} : memref<8x512xf32, #tpu.memory_space<vmem>>, vector<8x512xf32>,
    return
  }
}

</mosaic_0001>

<llo_original>
// kernel: tpu_custom_call.1
$region0: #{tpu_custom_call.1}
  #allocation0 [shape = 'u32[]', space=smem, size = 0x4, offset = 0x4, fixed_abs, tag = 'smem constant byte address 0x4 - core index']
  #allocation1 [shape = 'u32[144,128]{1,0:T(1,128)}', space=vmem, size = 0x12000, scoped, tag = 'internal scratch']
  %s0 = inlined_call_operand.hbm [shape: f32[8,512], index: 0, kind: input, shape index: {}]
  %s1 = inlined_call_operand.hbm [shape: f32[8,512], index: 1, kind: input, shape index: {}]
  %s2 = inlined_call_operand.hbm [shape: f32[8,512], index: 2, kind: output, shape index: {0}]
  %s3 = inlined_call_operand.hbm [shape: f32[8,512], index: 3, kind: output, shape index: {1}]
  %s4 = inlined_call_operand.hbm [shape: f32[8,512], index: 4, kind: output, shape index: {2}]
  %5 = xla_tuple %s2, %s3, %s4
  %s6 = sld [smem:[#allocation0]]
  $region42: #{tpu_custom_call.1} parent=0
    _
  %s8 = ssub.s32 1, %s6
  %s9 = scalar_select 0, %s8, %s6
  $region1: #{tpu_custom_call.1} parent=0
    #allocation2 [shape = 'u8[16384]{0}', space=vmem, size = 0x4000, scoped, tag = 'input window, operand 0, single buffered']
    #allocation3 [shape = 's32[1]{0}', space=sflag, size = 0x4, scoped, tag = 'scoped memory for tpu_custom_call.1']
    #allocation4 [shape = 's32[1]{0}', space=sflag, size = 0x4, scoped, tag = 'scoped memory for tpu_custom_call.1']
    #allocation5 [shape = 'u8[16384]{0}', space=vmem, size = 0x4000, scoped, tag = 'input window, operand 1, single buffered']
    #allocation6 [shape = 's32[1]{0}', space=sflag, size = 0x4, scoped, tag = 'scoped memory for tpu_custom_call.1']
    #allocation7 [shape = 'u8[16384]{0}', space=vmem, size = 0x4000, scoped, tag = 'output window, operand 0, single buffered']
    #allocation8 [shape = 'u8[16384]{0}', space=vmem, size = 0x4000, scoped, tag = 'output window, operand 1, single buffered']
    #allocation9 [shape = 's32[1]{0}', space=sflag, size = 0x4, scoped, tag = 'scoped memory for tpu_custom_call.1']
    #allocation10 [shape = 'u8[16384]{0}', space=vmem, size = 0x4000, scoped, tag = 'output window, operand 2, single buffered']
    %10 = vsyncpa [#allocation3], 0
    %11 = vsyncpa [#allocation6], 0
    %12 = vsyncpa [#allocation4], 0
    %13 = vsyncpa [#allocation9], 0
    // Predicated region
    $region2: #{tpu_custom_call.1} parent=1 // pred_check
      _
    $region3: #{tpu_custom_call.1} parent=1 // pred_check_branch
      %15 = sbr.rel (0) target = $region5
    $region4: #{tpu_custom_call.1} parent=1 // pred_region
      %s17 = ssub.s32 512, 512
      %18 = vsyncadd [#allocation3], %s17
      %s20 = sshll.u32 [#allocation2], 4
      %s21 = int_to_ptr.vmem [resolvable:$true] %s20
      %23 = dma.hbm_to_vmem [thread:$0]  %s0, 512, %s21, [#allocation3]
    $region5: #{tpu_custom_call.1} parent=1 // pred_fallthru
      _
    // Predicated region
    $region6: #{tpu_custom_call.1} parent=1 // pred_check
      _
    $region7: #{tpu_custom_call.1} parent=1 // pred_check_branch
      %25 = sbr.rel (0) target = $region9
    $region8: #{tpu_custom_call.1} parent=1 // pred_region
      %s27 = ssub.s32 512, 512
      %28 = vsyncadd [#allocation6], %s27
      %s30 = sshll.u32 [#allocation5], 4
      %s31 = int_to_ptr.vmem [resolvable:$true] %s30
      %33 = dma.hbm_to_vmem [thread:$0]  %s1, 512, %s31, [#allocation6]
    $region9: #{tpu_custom_call.1} parent=1 // pred_fallthru
      _
    // Predicated region
    $region10: #{tpu_custom_call.1} parent=1 // pred_check
      _
    $region11: #{tpu_custom_call.1} parent=1 // pred_check_branch
      %35 = sbr.rel (0) target = $region13
    $region12: #{tpu_custom_call.1} parent=1 // pred_region
      %36 = dma.done [#allocation3], 512
    $region13: #{tpu_custom_call.1} parent=1 // pred_fallthru
      _
    // Predicated region
    $region14: #{tpu_custom_call.1} parent=1 // pred_check
      _
    $region15: #{tpu_custom_call.1} parent=1 // pred_check_branch
      %38 = sbr.rel (0) target = $region17
    $region16: #{tpu_custom_call.1} parent=1 // pred_region
      %39 = dma.done [#allocation6], 512
    $region17: #{tpu_custom_call.1} parent=1 // pred_fallthru
      _
    %v40 = vld [vmem:[#allocation2] sm:$0xff]
    %v41 = vld [vmem:[#allocation2 + $0x8] sm:$0xff]
    %v42 = vld [vmem:[#allocation2 + $0x10] sm:$0xff]
    %v43 = vld [vmem:[#allocation2 + $0x18] sm:$0xff]
    %v44 = vld [vmem:[#allocation5] sm:$0xff]
    %v45 = vld [vmem:[#allocation5 + $0x8] sm:$0xff]
    %v46 = vld [vmem:[#allocation5 + $0x10] sm:$0xff]
    %v47 = vld [vmem:[#allocation5 + $0x18] sm:$0xff]
    %v48 = vmul.f32 %v40, %v44
    %v49 = vmul.f32 %v41, %v45
    %v50 = vmul.f32 %v42, %v46
    %v51 = vmul.f32 %v43, %v47
    %52 = vst [vmem:[#allocation7] sm:$0xff] %v48
    %53 = vst [vmem:[#allocation7 + $0x8] sm:$0xff] %v49
    %54 = vst [vmem:[#allocation7 + $0x10] sm:$0xff] %v50
    %55 = vst [vmem:[#allocation7 + $0x18] sm:$0xff] %v51
    %v56 = vadd.f32 %v40, %v44
    %v57 = vadd.f32 %v41, %v45
    %v58 = vadd.f32 %v42, %v46
    %v59 = vadd.f32 %v43, %v47
    %vm60 = vcmp.gt.f32.partialorder %v56, 0.0
    %vm61 = vcmp.gt.f32.partialorder %v57, 0.0
    %vm62 = vcmp.gt.f32.partialorder %v58, 0.0
    %vm63 = vcmp.gt.f32.partialorder %v59, 0.0
    %v64 = vsel %vm60, 1, 0
    %v65 = vsel %vm61, 1, 0
    %v66 = vsel %vm62, 1, 0
    %v67 = vsel %vm63, 1, 0
    %v68 = vcvt.s32.f32 %v64
    %v69 = vcvt.s32.f32 %v65
    %v70 = vcvt.s32.f32 %v66
    %v71 = vcvt.s32.f32 %v67
    %72 = vst [vmem:[#allocation8] sm:$0xff] %v68
    %73 = vst [vmem:[#allocation8 + $0x8] sm:$0xff] %v69
    %74 = vst [vmem:[#allocation8 + $0x10] sm:$0xff] %v70
    %75 = vst [vmem:[#allocation8 + $0x18] sm:$0xff] %v71
    %v76 = vsub.f32 1.0, %v68
    %v77 = vsub.f32 1.0, %v69
    %v78 = vsub.f32 1.0, %v70
    %v79 = vsub.f32 1.0, %v71
    %80 = vst [vmem:[#allocation10] sm:$0xff] %v76
    %81 = vst [vmem:[#allocation10 + $0x8] sm:$0xff] %v77
    %82 = vst [vmem:[#allocation10 + $0x10] sm:$0xff] %v78
    %83 = vst [vmem:[#allocation10 + $0x18] sm:$0xff] %v79
    // Predicated region
    $region18: #{tpu_custom_call.1} parent=1 // pred_check
      _
    $region19: #{tpu_custom_call.1} parent=1 // pred_check_branch
      %85 = sbr.rel (0) target = $region21
    $region20: #{tpu_custom_call.1} parent=1 // pred_region
      %s87 = ssub.s32 512, 512
      %88 = vsyncadd [#allocation4], %s87
      %s90 = sshll.u32 [#allocation7], 4
      %s91 = int_to_ptr.vmem [resolvable:$true] %s90
      %93 = dma.vmem_to_hbm [thread:$0]  %s91, 512, %s2, [#allocation4]
    $region21: #{tpu_custom_call.1} parent=1 // pred_fallthru
      _
    // Predicated region
    $region22: #{tpu_custom_call.1} parent=1 // pred_check
      _
    $region23: #{tpu_custom_call.1} parent=1 // pred_check_branch
      %95 = sbr.rel (0) target = $region25
    $region24: #{tpu_custom_call.1} parent=1 // pred_region
      %s97 = ssub.s32 512, 512
      %98 = vsyncadd [#allocation9], %s97
      %s100 = sshll.u32 [#allocation8], 4
      %s101 = int_to_ptr.vmem [resolvable:$true] %s100
      %103 = dma.vmem_to_hbm [thread:$0]  %s101, 512, %s3, [#allocation9]
    $region25: #{tpu_custom_call.1} parent=1 // pred_fallthru
      _
    // Predicated region
    $region26: #{tpu_custom_call.1} parent=1 // pred_check
      _
    $region27: #{tpu_custom_call.1} parent=1 // pred_check_branch
      %105 = sbr.rel (0) target = $region29
    $region28: #{tpu_custom_call.1} parent=1 // pred_region
      %s107 = ssub.s32 512, 512
      %108 = vsyncadd [#allocation9], %s107
      %s110 = sshll.u32 [#allocation10], 4
      %s111 = int_to_ptr.vmem [resolvable:$true] %s110
      %113 = dma.vmem_to_hbm [thread:$0]  %s111, 512, %s4, [#allocation9]
    $region29: #{tpu_custom_call.1} parent=1 // pred_fallthru
      _
    // Predicated region
    $region30: #{tpu_custom_call.1} parent=1 // pred_check
      _
    $region31: #{tpu_custom_call.1} parent=1 // pred_check_branch
      %115 = sbr.rel (0) target = $region33
    $region32: #{tpu_custom_call.1} parent=1 // pred_region
      %116 = dma.done [#allocation4], 512
    $region33: #{tpu_custom_call.1} parent=1 // pred_fallthru
      _
    // Predicated region
    $region34: #{tpu_custom_call.1} parent=1 // pred_check
      _
    $region35: #{tpu_custom_call.1} parent=1 // pred_check_branch
      %118 = sbr.rel (0) target = $region37
    $region36: #{tpu_custom_call.1} parent=1 // pred_region
      %119 = dma.done [#allocation9], 512
    $region37: #{tpu_custom_call.1} parent=1 // pred_fallthru
      _
    // Predicated region
    $region38: #{tpu_custom_call.1} parent=1 // pred_check
      _
    $region39: #{tpu_custom_call.1} parent=1 // pred_check_branch
      %121 = sbr.rel (0) target = $region41
    $region40: #{tpu_custom_call.1} parent=1 // pred_region
      %122 = dma.done [#allocation9], 512
    $region41: #{tpu_custom_call.1} parent=1 // pred_fallthru
      _
    %123 = vsyncpa [#allocation3], 1
    %124 = vsyncpa [#allocation6], 1
    %125 = vsyncpa [#allocation4], 1
    %126 = vsyncpa [#allocation9], 1

</llo_original>
